<compile_context>
chip_gen: v5e
topology: v5e:2x2
jax: 0.10.0
libtpu: 0.0.40
codegen_flags: <defaults>
</compile_context>

<pallas_src>
import functools

import jax
import jax.numpy as jnp
from jax.experimental import pallas as pl
from jax.experimental.pallas import tpu as pltpu


def _round_up(x, m):
    return ((x + m - 1) // m) * m


def _embed_kernel(ids_ref, f_ref, w_ref, out_ref, acc_ref, *, feat_col):
    """Grid step (i, k): accumulate the k-th vocab slice's contribution for tile i.

    ids_ref: (TM, 1)     int32   token ids for this token tile
    f_ref:   (TM, 1)     float32 per-token extra feature (goes to column 2*E)
    w_ref:   (TV, Ep)    fused [train | static | 0-pad] table slice (rows k*TV..)
    out_ref: (TM, Ep)    lane-dense output slab (Ep % 128 == 0), written at last k
    acc_ref: (TM, Ep)    f32 accumulator scratch (persists across the k axis)
    """
    k = pl.program_id(1)

    @pl.when(k == 0)
    def _():
        acc_ref[...] = jnp.zeros_like(acc_ref)

    ids = ids_ref[...]                                   # (TM, 1)
    tm = ids.shape[0]
    tv = w_ref.shape[0]

    # One-hot over this vocab slice on the VPU, then one MXU matmul gathers both
    # embedding tables at once (they live side-by-side on the feature axis).
    vocab_iota = k * tv + jax.lax.broadcasted_iota(jnp.int32, (tm, tv), dimension=1)
    onehot = (ids == vocab_iota).astype(w_ref.dtype)     # (TM, TV), exact 0/1
    acc_ref[...] += jnp.dot(onehot, w_ref[...], preferred_element_type=jnp.float32)

    @pl.when(k == pl.num_programs(1) - 1)
    def _():
        e_pad = out_ref.shape[1]
        # Place the width-1 feature column f at lane feat_col (= 2*E) in-kernel:
        # that lane exists anyway (e_pad >= 2E+1), so this is a free VPU select
        # instead of a separate full-HBM concatenate pass in the wrapper.
        col = jax.lax.broadcasted_iota(jnp.int32, (tm, e_pad), dimension=1)
        res = jnp.where(col == feat_col, f_ref[...], acc_ref[...])
        out_ref[...] = res.astype(out_ref.dtype)
        # Dropout (eval mode) == identity.


def choose_tiles(num_embeddings, embedding_dim, table_dtype=jnp.float32, *,
                 tm=128, table_tile_budget_bytes=4 << 20):
    """Pick token tile, vocab tile and padded table shape."""
    e_pad = _round_up(2 * embedding_dim + 1, 128)        # room for the f column
    itemsize = jnp.dtype(table_dtype).itemsize
    max_tv = max(8, (table_tile_budget_bytes // (e_pad * itemsize)) // 8 * 8)
    tv = min(_round_up(num_embeddings, 8), max_tv)
    v_pad = _round_up(num_embeddings, tv)
    return tm, tv, e_pad, v_pad


def build_fused_table(train_w, static_w, *, v_pad, e_pad, dtype=jnp.float32):
    """Fused [train | static] table, padded to (v_pad, e_pad).  Build ONCE, reuse."""
    V, E = train_w.shape
    w_cat = jnp.concatenate([train_w.astype(dtype), static_w.astype(dtype)], axis=1)
    return jnp.pad(w_cat, ((0, v_pad - V), (0, e_pad - 2 * E)))


def word_embedding_forward(xp, xq, fp, fq, w_cat, embedding_dim, *,
                           tm=128, tv=None, out_dtype=jnp.float32):
    """Pallas-backed equivalent of WordEmbedding.forward (eval mode).

    w_cat is the pre-built fused/padded table from build_fused_table (hoisted
    out of the per-call path — it is constant across calls).
    """
    B, L = xp.shape
    E = embedding_dim
    feat_col = 2 * E
    v_pad, e_pad = w_cat.shape
    assert e_pad % 128 == 0 and e_pad >= 2 * E + 1
    if tv is None:
        tv = v_pad
    assert v_pad % tv == 0
    v_steps = v_pad // tv

    # Stack both sequences so one pallas_call handles xp and xq.
    n_tok = B * L
    ids = jnp.concatenate([xp.reshape(-1), xq.reshape(-1)]).astype(jnp.int32)
    feats = jnp.concatenate([fp.reshape(-1), fq.reshape(-1)]).astype(jnp.float32)
    n_total = 2 * n_tok
    n_pad = _round_up(n_total, tm)
    pad = n_pad - n_total
    ids = jnp.pad(ids, (0, pad)).reshape(n_pad, 1)
    feats = jnp.pad(feats, (0, pad)).reshape(n_pad, 1)

    # Table spec: single-buffer it when it is resident (constant index_map),
    # halving its VMEM footprint; keep default double-buffering when V is tiled
    # so the next vocab slice's DMA overlaps the current matmul.
    table_idx = lambda i, k: (k, 0)
    if v_steps == 1:
        try:
            table_spec = pl.BlockSpec((tv, e_pad), table_idx,
                                      pipeline_mode=pl.Buffered(1))
        except TypeError:  # older BlockSpec without pipeline_mode
            table_spec = pl.BlockSpec((tv, e_pad), table_idx)
    else:
        table_spec = pl.BlockSpec((tv, e_pad), table_idx)

    # Raise (never lower) the scoped VMEM limit so big tables don't trip the
    # 16 MiB default on v5e; stays within v7x's 64 MiB physical ceiling.
    table_bufs = 1 if v_steps == 1 else 2
    needed = (table_bufs * tv * e_pad * jnp.dtype(w_cat.dtype).itemsize
              + 2 * tm * e_pad * jnp.dtype(out_dtype).itemsize   # out double-buffer
              + tm * e_pad * 4                                   # f32 accumulator
              + 4 * tm * 4                                       # ids + feats tiles
              + (2 << 20))                                       # headroom
    vmem_limit = int(min(max(needed, 32 << 20), 64 << 20))

    kernel = functools.partial(_embed_kernel, feat_col=feat_col)

    out_flat = pl.pallas_call(
        kernel,
        out_shape=jax.ShapeDtypeStruct((n_pad, e_pad), out_dtype),
        grid_spec=pltpu.PrefetchScalarGridSpec(
            num_scalar_prefetch=0,
            grid=(n_pad // tm, v_steps),
            in_specs=[
                pl.BlockSpec((tm, 1), lambda i, k: (i, 0)),   # token ids
                pl.BlockSpec((tm, 1), lambda i, k: (i, 0)),   # per-token feature f
                table_spec,                                   # fused table slice
            ],
            out_specs=pl.BlockSpec((tm, e_pad), lambda i, k: (i, 0)),
            scratch_shapes=[pltpu.VMEM((tm, e_pad), jnp.float32)],
        ),
        compiler_params=pltpu.CompilerParams(
            dimension_semantics=("parallel", "arbitrary"),
            vmem_limit_bytes=vmem_limit,
        ),
    )(ids, feats, w_cat)

    # Wrapper side is now just a slice (no concatenate pass over the output).
    emb = out_flat[:n_total, :2 * E + 1]
    out_p = emb[:n_tok].reshape(B, L, 2 * E + 1)
    out_q = emb[n_tok:].reshape(B, L, 2 * E + 1)
    return out_p, out_q


if __name__ == "__main__":
    # Small, deterministic configuration.
    num_embeddings = 64   # vocab size V
    embedding_dim = 32    # E
    B, L = 2, 8           # batch, sequence length

    key = jax.random.PRNGKey(0)
    k_tw, k_sw, k_xp, k_xq, k_fp, k_fq = jax.random.split(key, 6)

    train_w = jax.random.normal(k_tw, (num_embeddings, embedding_dim), dtype=jnp.float32)
    static_w = jax.random.normal(k_sw, (num_embeddings, embedding_dim), dtype=jnp.float32)

    xp = jax.random.randint(k_xp, (B, L), 0, num_embeddings, dtype=jnp.int32)
    xq = jax.random.randint(k_xq, (B, L), 0, num_embeddings, dtype=jnp.int32)
    fp = jax.random.normal(k_fp, (B, L), dtype=jnp.float32)
    fq = jax.random.normal(k_fq, (B, L), dtype=jnp.float32)

    # Fused/padded table built ONCE, outside the forward path (hoisted).
    tm, tv, e_pad, v_pad = choose_tiles(num_embeddings, embedding_dim, jnp.float32)
    w_cat = build_fused_table(train_w, static_w, v_pad=v_pad, e_pad=e_pad)

    out_p, out_q = word_embedding_forward(xp, xq, fp, fq, w_cat, embedding_dim,
                                          tm=tm, tv=tv)
    jax.block_until_ready((out_p, out_q))

    # Pure-JAX reference (embedding gather + concat, dropout = eval identity).
    def ref_single(x, f):
        return jnp.concatenate([train_w[x], static_w[x], f[..., None]], axis=2)

    ref_p, ref_q = ref_single(xp, fp), ref_single(xq, fq)
    D = 2 * embedding_dim + 1
    assert out_p.shape == (B, L, D) and out_q.shape == (B, L, D)
    assert jnp.allclose(out_p, ref_p, atol=1e-5)
    assert jnp.allclose(out_q, ref_q, atol=1e-5)

    # Exercise the V-tiled accumulator path used for large vocabularies.
    out_p2, out_q2 = word_embedding_forward(xp, xq, fp, fq, w_cat, embedding_dim,
                                            tm=tm, tv=32)
    jax.block_until_ready((out_p2, out_q2))
    assert jnp.allclose(out_p2, ref_p, atol=1e-5)
    assert jnp.allclose(out_q2, ref_q, atol=1e-5)

    # Exercise the bf16-output path (halves the dominant store traffic on real shapes).
    out_p3, out_q3 = word_embedding_forward(xp, xq, fp, fq, w_cat, embedding_dim,
                                            tm=tm, tv=tv, out_dtype=jnp.bfloat16)
    jax.block_until_ready((out_p3, out_q3))
    assert jnp.allclose(out_p3.astype(jnp.float32), ref_p, atol=5e-2, rtol=5e-2)
    assert jnp.allclose(out_q3.astype(jnp.float32), ref_q, atol=5e-2, rtol=5e-2)

    print("KERNEL_OK")
</pallas_src>

<mosaic_0001>
module attributes {stable_mosaic.version = 11 : i64} {
  func.func @_embed_kernel(%arg0: i32, %arg1: i32, %arg2: memref<128x1xi32, #tpu.memory_space<vmem>>, %arg3: memref<128x1xf32, #tpu.memory_space<vmem>>, %arg4: memref<64x128xf32, #tpu.memory_space<vmem>>, %arg5: memref<128x128xf32, #tpu.memory_space<vmem>>, %arg6: memref<128x128xf32, #tpu.memory_space<vmem>>) attributes {dimension_semantics = [#tpu.dimension_semantics<parallel>, #tpu.dimension_semantics<arbitrary>], iteration_bounds = array<i64: 1, 1>, scalar_prefetch = 0 : i64, scratch_operands = 1 : i64, tpu.core_type = #tpu.core_type<tc>, window_params = [{transform_indices = @transform_0, window_bounds = array<i64: 128, 1>}, {transform_indices = @transform_1, window_bounds = array<i64: 128, 1>}, {pipeline_mode = #tpu.pipeline_mode<synchronous>, transform_indices = @transform_2, window_bounds = array<i64: 64, 128>}, {transform_indices = @transform_3, window_bounds = array<i64: 128, 128>}]} {
    %c0_i32 = arith.constant 0 : i32
    %0 = arith.cmpi eq, %arg1, %c0_i32 : i32
    %1 = arith.extui %0 : i1 to i32
    %c0_i32_0 = arith.constant 0 : i32
    %2 = arith.cmpi ne, %1, %c0_i32_0 : i32
    scf.if %2 {
      %cst_10 = arith.constant 0.000000e+00 : f32
      %20 = vector.broadcast %cst_10 : f32 to vector<128x128xf32>
      %c0_11 = arith.constant 0 : index
      %c0_12 = arith.constant 0 : index
      %21 = vector.load %arg6[%c0_11, %c0_12] : memref<128x128xf32, #tpu.memory_space<vmem>>, vector<128x128xf32>
      tpu.vector_store %arg6[%c0_11, %c0_12], %20 {strides = array<i32>} : memref<128x128xf32, #tpu.memory_space<vmem>>, vector<128x128xf32>,
    } else {
    }
    %c0 = arith.constant 0 : index
    %c0_1 = arith.constant 0 : index
    %3 = vector.load %arg2[%c0, %c0_1] : memref<128x1xi32, #tpu.memory_space<vmem>>, vector<128x1xi32>
    %c64_i32 = arith.constant 64 : i32
    %4 = arith.muli %arg1, %c64_i32 : i32
    %5 = tpu.iota {dimensions = array<i32: 1>} : vector<128x64xi32>
    %6 = vector.broadcast %4 : i32 to vector<128x64xi32>
    %7 = arith.addi %6, %5 : vector<128x64xi32>
    %8 = vector.broadcast %3 : vector<128x1xi32> to vector<128x64xi32>
    %9 = arith.cmpi eq, %8, %7 : vector<128x64xi32>
    %10 = arith.extui %9 : vector<128x64xi1> to vector<128x64xi32>
    %11 = arith.sitofp %10 : vector<128x64xi32> to vector<128x64xf32>
    %c0_2 = arith.constant 0 : index
    %c0_3 = arith.constant 0 : index
    %12 = vector.load %arg6[%c0_2, %c0_3] : memref<128x128xf32, #tpu.memory_space<vmem>>, vector<128x128xf32>
    %c0_4 = arith.constant 0 : index
    %c0_5 = arith.constant 0 : index
    %13 = vector.load %arg4[%c0_4, %c0_5] : memref<64x128xf32, #tpu.memory_space<vmem>>, vector<64x128xf32>
    %cst = arith.constant dense<0.000000e+00> : vector<128x128xf32>
    %14 = tpu.matmul %11, %13, %cst {dimension_numbers = #tpu.dot_dimension_numbers<[1], [0], [0], [1], [0, 0, 1, 1], [], []>} : vector<128x64xf32>, vector<64x128xf32>, vector<128x128xf32> -> vector<128x128xf32>
    %15 = arith.addf %12, %14 : vector<128x128xf32>
    %c0_6 = arith.constant 0 : index
    %c0_7 = arith.constant 0 : index
    %16 = vector.load %arg6[%c0_6, %c0_7] : memref<128x128xf32, #tpu.memory_space<vmem>>, vector<128x128xf32>
    tpu.vector_store %arg6[%c0_6, %c0_7], %15 {strides = array<i32>} : memref<128x128xf32, #tpu.memory_space<vmem>>, vector<128x128xf32>,
    %c0_i32_8 = arith.constant 0 : i32
    %17 = arith.cmpi eq, %arg1, %c0_i32_8 : i32
    %18 = arith.extui %17 : i1 to i32
    %c0_i32_9 = arith.constant 0 : i32
    %19 = arith.cmpi ne, %18, %c0_i32_9 : i32
    scf.if %19 {
      %20 = tpu.iota {dimensions = array<i32: 1>} : vector<128x128xi32>
      %c64_i32_10 = arith.constant 64 : i32
      %21 = vector.broadcast %c64_i32_10 : i32 to vector<128x128xi32>
      %22 = arith.cmpi eq, %20, %21 : vector<128x128xi32>
      %c0_11 = arith.constant 0 : index
      %c0_12 = arith.constant 0 : index
      %23 = vector.load %arg3[%c0_11, %c0_12] : memref<128x1xf32, #tpu.memory_space<vmem>>, vector<128x1xf32>
      %c0_13 = arith.constant 0 : index
      %c0_14 = arith.constant 0 : index
      %24 = vector.load %arg6[%c0_13, %c0_14] : memref<128x128xf32, #tpu.memory_space<vmem>>, vector<128x128xf32>
      %25 = vector.shape_cast %23 : vector<128x1xf32> to vector<128x1xf32>
      %26 = vector.broadcast %25 : vector<128x1xf32> to vector<128x128xf32>
      %27 = arith.select %22, %26, %24 : vector<128x128xi1>, vector<128x128xf32>
      %c0_15 = arith.constant 0 : index
      %c0_16 = arith.constant 0 : index
      %28 = vector.load %arg5[%c0_15, %c0_16] : memref<128x128xf32, #tpu.memory_space<vmem>>, vector<128x128xf32>
      tpu.vector_store %arg5[%c0_15, %c0_16], %27 {strides = array<i32>} : memref<128x128xf32, #tpu.memory_space<vmem>>, vector<128x128xf32>,
    } else {
    }
    return
  }
  func.func @transform_0(%arg0: i32, %arg1: i32) -> (i32, i32) {
    %c0_i32 = arith.constant 0 : i32
    %c0_i32_0 = arith.constant 0 : i32
    return %arg0, %c0_i32 : i32, i32
  }
  func.func @transform_1(%arg0: i32, %arg1: i32) -> (i32, i32) {
    %c0_i32 = arith.constant 0 : i32
    %c0_i32_0 = arith.constant 0 : i32
    return %arg0, %c0_i32 : i32, i32
  }
  func.func @transform_2(%arg0: i32, %arg1: i32) -> (i32, i32) {
    %c0_i32 = arith.constant 0 : i32
    %c0_i32_0 = arith.constant 0 : i32
    return %arg1, %c0_i32 : i32, i32
  }
  func.func @transform_3(%arg0: i32, %arg1: i32) -> (i32, i32) {
    %c0_i32 = arith.constant 0 : i32
    %c0_i32_0 = arith.constant 0 : i32
    return %arg0, %c0_i32 : i32, i32
  }
}

</mosaic_0001>

<llo_original>
// kernel: tpu_custom_call.1
$region0: #{tpu_custom_call.1}
  #allocation0 [shape = 'u32[]', space=smem, size = 0x4, offset = 0x4, fixed_abs, tag = 'smem constant byte address 0x4 - core index']
  #allocation1 [shape = 'u32[72,128]{1,0:T(1,128)}', space=vmem, size = 0x9000, scoped, tag = 'internal scratch']
  #allocation2 [shape = 'f32[128,128]{1,0:T(8,128)}', space=vmem, size = 0x10000, scoped, tag = 'scratch operand']
  %s0 = inlined_call_operand.vmem [shape: s32[128,1], index: 0, kind: input, shape index: {}]
  %s1 = inlined_call_operand.vmem [shape: f32[128,1], index: 1, kind: input, shape index: {}]
  %s2 = inlined_call_operand.vmem [shape: f32[64,128], index: 2, kind: input, shape index: {}]
  %s3 = inlined_call_operand.hbm [shape: f32[128,128], index: 3, kind: output, shape index: {}]
  %s4 = sld [smem:[#allocation0]]
  $region30: #{tpu_custom_call.1} parent=0
    _
  %s6 = ssub.s32 1, %s4
  %s7 = scalar_select 0, %s6, %s4
  $region1: #{tpu_custom_call.1} parent=0
    #allocation3 [shape = 'u8[65536]{0}', space=vmem, size = 0x10000, scoped, tag = 'output window, operand 0, single buffered']
    #allocation4 [shape = 's32[1]{0}', space=sflag, size = 0x4, scoped, tag = 'scoped memory for tpu_custom_call.1']
    %8 = vsyncpa [#allocation4], 0
    // Predicated region
    $region2: #{tpu_custom_call.1} parent=1 // pred_check
      _
    $region3: #{tpu_custom_call.1} parent=1 // pred_check_branch
      %10 = sbr.rel (0) target = $region5
    $region4: #{tpu_custom_call.1} parent=1 // pred_region
      _
    $region5: #{tpu_custom_call.1} parent=1 // pred_fallthru
      _
    // Predicated region
    $region6: #{tpu_custom_call.1} parent=1 // pred_check
      _
    $region7: #{tpu_custom_call.1} parent=1 // pred_check_branch
      %12 = sbr.rel (0) target = $region9
    $region8: #{tpu_custom_call.1} parent=1 // pred_region
      _
    $region9: #{tpu_custom_call.1} parent=1 // pred_fallthru
      _
    // Predicated region
    $region10: #{tpu_custom_call.1} parent=1 // pred_check
      _
    $region11: #{tpu_custom_call.1} parent=1 // pred_check_branch
      %14 = sbr.rel (0) target = $region13
    $region12: #{tpu_custom_call.1} parent=1 // pred_region
      _
    $region13: #{tpu_custom_call.1} parent=1 // pred_fallthru
      _
    %p15 = scmp.eq.s32.totalorder 0, 0
    // Predicated region
    $region14: #{tpu_custom_call.1} parent=1 // pred_check
      %p16 = pneg %p15
    $region15: #{tpu_custom_call.1} parent=1 // pred_check_branch
      %18 = sbr.rel (%p16) target = $region17
    $region16: #{tpu_custom_call.1} parent=1 // pred_region
      %19 = vst [vmem:[#allocation2] sm:$0xff] 0.0
      %20 = vst [vmem:[#allocation2 + $0x8] sm:$0xff] 0.0
      %21 = vst [vmem:[#allocation2 + $0x10] sm:$0xff] 0.0
      %22 = vst [vmem:[#allocation2 + $0x18] sm:$0xff] 0.0
      %23 = vst [vmem:[#allocation2 + $0x20] sm:$0xff] 0.0
      %24 = vst [vmem:[#allocation2 + $0x28] sm:$0xff] 0.0
      %25 = vst [vmem:[#allocation2 + $0x30] sm:$0xff] 0.0
      %26 = vst [vmem:[#allocation2 + $0x38] sm:$0xff] 0.0
      %27 = vst [vmem:[#allocation2 + $0x40] sm:$0xff] 0.0
      %28 = vst [vmem:[#allocation2 + $0x48] sm:$0xff] 0.0
      %29 = vst [vmem:[#allocation2 + $0x50] sm:$0xff] 0.0
      %30 = vst [vmem:[#allocation2 + $0x58] sm:$0xff] 0.0
      %31 = vst [vmem:[#allocation2 + $0x60] sm:$0xff] 0.0
      %32 = vst [vmem:[#allocation2 + $0x68] sm:$0xff] 0.0
      %33 = vst [vmem:[#allocation2 + $0x70] sm:$0xff] 0.0
      %34 = vst [vmem:[#allocation2 + $0x78] sm:$0xff] 0.0
    $region17: #{tpu_custom_call.1} parent=1 // pred_fallthru
      _
    %v35 = vld [vmem:[%s0] sm:$0xff]
    %v36 = vld [vmem:[%s0 + $0x8] sm:$0xff]
    %v37 = vld [vmem:[%s0 + $0x10] sm:$0xff]
    %v38 = vld [vmem:[%s0 + $0x18] sm:$0xff]
    %v39 = vld [vmem:[%s0 + $0x20] sm:$0xff]
    %v40 = vld [vmem:[%s0 + $0x28] sm:$0xff]
    %v41 = vld [vmem:[%s0 + $0x30] sm:$0xff]
    %v42 = vld [vmem:[%s0 + $0x38] sm:$0xff]
    %v43 = vld [vmem:[%s0 + $0x40] sm:$0xff]
    %v44 = vld [vmem:[%s0 + $0x48] sm:$0xff]
    %v45 = vld [vmem:[%s0 + $0x50] sm:$0xff]
    %v46 = vld [vmem:[%s0 + $0x58] sm:$0xff]
    %v47 = vld [vmem:[%s0 + $0x60] sm:$0xff]
    %v48 = vld [vmem:[%s0 + $0x68] sm:$0xff]
    %v49 = vld [vmem:[%s0 + $0x70] sm:$0xff]
    %v50 = vld [vmem:[%s0 + $0x78] sm:$0xff]
    %s51 = smul.u32 0, 64
    %v52 = vlaneseq
    %v53 = vand.u32 %v52, 127
    %v54 = vstv %s51
    %v55 = vadd.s32 %v54, %v53
    %56 = vset.pattern.permute.xlu0 0
    %57 = vperm.xlu0 %56, %v35
    %v58 = vpop.permute.xlu0 %57
    %59 = vset.pattern.permute.xlu0 0
    %60 = vperm.xlu0 %59, %v36
    %v61 = vpop.permute.xlu0 %60
    %62 = vset.pattern.permute.xlu0 0
    %63 = vperm.xlu0 %62, %v37
    %v64 = vpop.permute.xlu0 %63
    %65 = vset.pattern.permute.xlu0 0
    %66 = vperm.xlu0 %65, %v38
    %v67 = vpop.permute.xlu0 %66
    %68 = vset.pattern.permute.xlu0 0
    %69 = vperm.xlu0 %68, %v39
    %v70 = vpop.permute.xlu0 %69
    %71 = vset.pattern.permute.xlu0 0
    %72 = vperm.xlu0 %71, %v40
    %v73 = vpop.permute.xlu0 %72
    %74 = vset.pattern.permute.xlu0 0
    %75 = vperm.xlu0 %74, %v41
    %v76 = vpop.permute.xlu0 %75
    %77 = vset.pattern.permute.xlu0 0
    %78 = vperm.xlu0 %77, %v42
    %v79 = vpop.permute.xlu0 %78
    %80 = vset.pattern.permute.xlu0 0
    %81 = vperm.xlu0 %80, %v43
    %v82 = vpop.permute.xlu0 %81
    %83 = vset.pattern.permute.xlu0 0
    %84 = vperm.xlu0 %83, %v44
    %v85 = vpop.permute.xlu0 %84
    %86 = vset.pattern.permute.xlu0 0
    %87 = vperm.xlu0 %86, %v45
    %v88 = vpop.permute.xlu0 %87
    %89 = vset.pattern.permute.xlu0 0
    %90 = vperm.xlu0 %89, %v46
    %v91 = vpop.permute.xlu0 %90
    %92 = vset.pattern.permute.xlu0 0
    %93 = vperm.xlu0 %92, %v47
    %v94 = vpop.permute.xlu0 %93
    %95 = vset.pattern.permute.xlu0 0
    %96 = vperm.xlu0 %95, %v48
    %v97 = vpop.permute.xlu0 %96
    %98 = vset.pattern.permute.xlu0 0
    %99 = vperm.xlu0 %98, %v49
    %v100 = vpop.permute.xlu0 %99
    %101 = vset.pattern.permute.xlu0 0
    %102 = vperm.xlu0 %101, %v50
    %v103 = vpop.permute.xlu0 %102
    %vm104 = vcmp.eq.s32.totalorder %v58, %v55
    %vm105 = vcmp.eq.s32.totalorder %v61, %v55
    %vm106 = vcmp.eq.s32.totalorder %v64, %v55
    %vm107 = vcmp.eq.s32.totalorder %v67, %v55
    %vm108 = vcmp.eq.s32.totalorder %v70, %v55
    %vm109 = vcmp.eq.s32.totalorder %v73, %v55
    %vm110 = vcmp.eq.s32.totalorder %v76, %v55
    %vm111 = vcmp.eq.s32.totalorder %v79, %v55
    %vm112 = vcmp.eq.s32.totalorder %v82, %v55
    %vm113 = vcmp.eq.s32.totalorder %v85, %v55
    %vm114 = vcmp.eq.s32.totalorder %v88, %v55
    %vm115 = vcmp.eq.s32.totalorder %v91, %v55
    %vm116 = vcmp.eq.s32.totalorder %v94, %v55
    %vm117 = vcmp.eq.s32.totalorder %v97, %v55
    %vm118 = vcmp.eq.s32.totalorder %v100, %v55
    %vm119 = vcmp.eq.s32.totalorder %v103, %v55
    %v120 = vsel %vm104, 1, 0
    %v121 = vsel %vm105, 1, 0
    %v122 = vsel %vm106, 1, 0
    %v123 = vsel %vm107, 1, 0
    %v124 = vsel %vm108, 1, 0
    %v125 = vsel %vm109, 1, 0
    %v126 = vsel %vm110, 1, 0
    %v127 = vsel %vm111, 1, 0
    %v128 = vsel %vm112, 1, 0
    %v129 = vsel %vm113, 1, 0
    %v130 = vsel %vm114, 1, 0
    %v131 = vsel %vm115, 1, 0
    %v132 = vsel %vm116, 1, 0
    %v133 = vsel %vm117, 1, 0
    %v134 = vsel %vm118, 1, 0
    %v135 = vsel %vm119, 1, 0
    %v136 = vcvt.s32.f32 %v120
    %v137 = vcvt.s32.f32 %v121
    %v138 = vcvt.s32.f32 %v122
    %v139 = vcvt.s32.f32 %v123
    %v140 = vcvt.s32.f32 %v124
    %v141 = vcvt.s32.f32 %v125
    %v142 = vcvt.s32.f32 %v126
    %v143 = vcvt.s32.f32 %v127
    %v144 = vcvt.s32.f32 %v128
    %v145 = vcvt.s32.f32 %v129
    %v146 = vcvt.s32.f32 %v130
    %v147 = vcvt.s32.f32 %v131
    %v148 = vcvt.s32.f32 %v132
    %v149 = vcvt.s32.f32 %v133
    %v150 = vcvt.s32.f32 %v134
    %v151 = vcvt.s32.f32 %v135
    %v152 = vld [vmem:[#allocation2] sm:$0xff]
    %v153 = vld [vmem:[#allocation2 + $0x8] sm:$0xff]
    %v154 = vld [vmem:[#allocation2 + $0x10] sm:$0xff]
    %v155 = vld [vmem:[#allocation2 + $0x18] sm:$0xff]
    %v156 = vld [vmem:[#allocation2 + $0x20] sm:$0xff]
    %v157 = vld [vmem:[#allocation2 + $0x28] sm:$0xff]
    %v158 = vld [vmem:[#allocation2 + $0x30] sm:$0xff]
    %v159 = vld [vmem:[#allocation2 + $0x38] sm:$0xff]
    %v160 = vld [vmem:[#allocation2 + $0x40] sm:$0xff]
    %v161 = vld [vmem:[#allocation2 + $0x48] sm:$0xff]
    %v162 = vld [vmem:[#allocation2 + $0x50] sm:$0xff]
    %v163 = vld [vmem:[#allocation2 + $0x58] sm:$0xff]
    %v164 = vld [vmem:[#allocation2 + $0x60] sm:$0xff]
    %v165 = vld [vmem:[#allocation2 + $0x68] sm:$0xff]
    %v166 = vld [vmem:[#allocation2 + $0x70] sm:$0xff]
    %v167 = vld [vmem:[#allocation2 + $0x78] sm:$0xff]
    %v168 = vld [vmem:[%s2] sm:$0xff]
    %v169 = vld [vmem:[%s2 + $0x8] sm:$0xff]
    %v170 = vld [vmem:[%s2 + $0x10] sm:$0xff]
    %v171 = vld [vmem:[%s2 + $0x18] sm:$0xff]
    %v172 = vld [vmem:[%s2 + $0x20] sm:$0xff]
    %v173 = vld [vmem:[%s2 + $0x28] sm:$0xff]
    %v174 = vld [vmem:[%s2 + $0x30] sm:$0xff]
    %v175 = vld [vmem:[%s2 + $0x38] sm:$0xff]
    %vm176 = vcmask 523264
    %v178 = vsel %vm176, %v136, 0
    %v181 = vsel %vm176, %v137, 0
    %v184 = vsel %vm176, %v138, 0
    %v187 = vsel %vm176, %v139, 0
    %v190 = vsel %vm176, %v140, 0
    %v193 = vsel %vm176, %v141, 0
    %v196 = vsel %vm176, %v142, 0
    %v199 = vsel %vm176, %v143, 0
    %v202 = vsel %vm176, %v144, 0
    %v205 = vsel %vm176, %v145, 0
    %v208 = vsel %vm176, %v146, 0
    %v211 = vsel %vm176, %v147, 0
    %v214 = vsel %vm176, %v148, 0
    %v217 = vsel %vm176, %v149, 0
    %v220 = vsel %vm176, %v150, 0
    %v223 = vsel %vm176, %v151, 0
    %225 = vmatpush.msra.mxu0 0.0
    %226 = vmatpush.msra.mxu0 0.0
    %227 = vmatpush.msra.mxu0 0.0
    %228 = vmatpush.msra.mxu0 0.0
    %229 = vmatpush.msra.mxu0 0.0
    %230 = vmatpush.msra.mxu0 0.0
    %231 = vmatpush.msra.mxu0 0.0
    %232 = vmatpush.msra.mxu0 0.0
    %233 = vmatpush.msra.mxu0 %v175
    %234 = vmatpush.msra.mxu0 %v174
    %235 = vmatpush.msra.mxu0 %v173
    %236 = vmatpush.msra.mxu0 %v172
    %237 = vmatpush.msra.mxu0 %v171
    %238 = vmatpush.msra.mxu0 %v170
    %239 = vmatpush.msra.mxu0 %v169
    %240 = vmatpush.msra.mxu0 %v168
    %241 = vmatmul.f32.gmra.mxu0 %v178
    %v242 = vpop.f32.mrf.mxu0
    %v243 = vadd.f32 0.0, %v242
    %244 = vmatmul.f32.gmra.mxu0 %v181
    %v245 = vpop.f32.mrf.mxu0
    %v246 = vadd.f32 0.0, %v245
    %247 = vmatmul.f32.gmra.mxu0 %v184
    %v248 = vpop.f32.mrf.mxu0
    %v249 = vadd.f32 0.0, %v248
    %250 = vmatmul.f32.gmra.mxu0 %v187
    %v251 = vpop.f32.mrf.mxu0
    %v252 = vadd.f32 0.0, %v251
    %253 = vmatmul.f32.gmra.mxu0 %v190
    %v254 = vpop.f32.mrf.mxu0
    %v255 = vadd.f32 0.0, %v254
    %256 = vmatmul.f32.gmra.mxu0 %v193
    %v257 = vpop.f32.mrf.mxu0
    %v258 = vadd.f32 0.0, %v257
    %259 = vmatmul.f32.gmra.mxu0 %v196
    %v260 = vpop.f32.mrf.mxu0
    %v261 = vadd.f32 0.0, %v260
    %262 = vmatmul.f32.gmra.mxu0 %v199
    %v263 = vpop.f32.mrf.mxu0
    %v264 = vadd.f32 0.0, %v263
    %265 = vmatmul.f32.gmra.mxu0 %v202
    %v266 = vpop.f32.mrf.mxu0
    %v267 = vadd.f32 0.0, %v266
    %268 = vmatmul.f32.gmra.mxu0 %v205
    %v269 = vpop.f32.mrf.mxu0
    %v270 = vadd.f32 0.0, %v269
    %271 = vmatmul.f32.gmra.mxu0 %v208
    %v272 = vpop.f32.mrf.mxu0
    %v273 = vadd.f32 0.0, %v272
    %274 = vmatmul.f32.gmra.mxu0 %v211
    %v275 = vpop.f32.mrf.mxu0
    %v276 = vadd.f32 0.0, %v275
    %277 = vmatmul.f32.gmra.mxu0 %v214
    %v278 = vpop.f32.mrf.mxu0
    %v279 = vadd.f32 0.0, %v278
    %280 = vmatmul.f32.gmra.mxu0 %v217
    %v281 = vpop.f32.mrf.mxu0
    %v282 = vadd.f32 0.0, %v281
    %283 = vmatmul.f32.gmra.mxu0 %v220
    %v284 = vpop.f32.mrf.mxu0
    %v285 = vadd.f32 0.0, %v284
    %286 = vmatmul.f32.gmra.mxu0 %v223
    %v287 = vpop.f32.mrf.mxu0
    %v288 = vadd.f32 0.0, %v287
    %289 = vdwg.mxu0
    %v290 = vadd.f32 %v152, %v243
    %v291 = vadd.f32 %v153, %v246
    %v292 = vadd.f32 %v154, %v249
    %v293 = vadd.f32 %v155, %v252
    %v294 = vadd.f32 %v156, %v255
    %v295 = vadd.f32 %v157, %v258
    %v296 = vadd.f32 %v158, %v261
    %v297 = vadd.f32 %v159, %v264
    %v298 = vadd.f32 %v160, %v267
    %v299 = vadd.f32 %v161, %v270
    %v300 = vadd.f32 %v162, %v273
    %v301 = vadd.f32 %v163, %v276
    %v302 = vadd.f32 %v164, %v279
    %v303 = vadd.f32 %v165, %v282
    %v304 = vadd.f32 %v166, %v285
    %v305 = vadd.f32 %v167, %v288
    %306 = vst [vmem:[#allocation2] sm:$0xff] %v290
    %307 = vst [vmem:[#allocation2 + $0x8] sm:$0xff] %v291
    %308 = vst [vmem:[#allocation2 + $0x10] sm:$0xff] %v292
    %309 = vst [vmem:[#allocation2 + $0x18] sm:$0xff] %v293
    %310 = vst [vmem:[#allocation2 + $0x20] sm:$0xff] %v294
    %311 = vst [vmem:[#allocation2 + $0x28] sm:$0xff] %v295
    %312 = vst [vmem:[#allocation2 + $0x30] sm:$0xff] %v296
    %313 = vst [vmem:[#allocation2 + $0x38] sm:$0xff] %v297
    %314 = vst [vmem:[#allocation2 + $0x40] sm:$0xff] %v298
    %315 = vst [vmem:[#allocation2 + $0x48] sm:$0xff] %v299
    %316 = vst [vmem:[#allocation2 + $0x50] sm:$0xff] %v300
    %317 = vst [vmem:[#allocation2 + $0x58] sm:$0xff] %v301
    %318 = vst [vmem:[#allocation2 + $0x60] sm:$0xff] %v302
    %319 = vst [vmem:[#allocation2 + $0x68] sm:$0xff] %v303
    %320 = vst [vmem:[#allocation2 + $0x70] sm:$0xff] %v304
    %321 = vst [vmem:[#allocation2 + $0x78] sm:$0xff] %v305
    // Predicated region
    $region18: #{tpu_custom_call.1} parent=1 // pred_check
      %p322 = pneg %p15
    $region19: #{tpu_custom_call.1} parent=1 // pred_check_branch
      %324 = sbr.rel (%p322) target = $region21
    $region20: #{tpu_custom_call.1} parent=1 // pred_region
      %vm325 = vcmp.eq.s32.totalorder %v53, 64
      %v326 = vld [vmem:[%s1] sm:$0xff]
      %v327 = vld [vmem:[%s1 + $0x8] sm:$0xff]
      %v328 = vld [vmem:[%s1 + $0x10] sm:$0xff]
      %v329 = vld [vmem:[%s1 + $0x18] sm:$0xff]
      %v330 = vld [vmem:[%s1 + $0x20] sm:$0xff]
      %v331 = vld [vmem:[%s1 + $0x28] sm:$0xff]
      %v332 = vld [vmem:[%s1 + $0x30] sm:$0xff]
      %v333 = vld [vmem:[%s1 + $0x38] sm:$0xff]
      %v334 = vld [vmem:[%s1 + $0x40] sm:$0xff]
      %v335 = vld [vmem:[%s1 + $0x48] sm:$0xff]
      %v336 = vld [vmem:[%s1 + $0x50] sm:$0xff]
      %v337 = vld [vmem:[%s1 + $0x58] sm:$0xff]
      %v338 = vld [vmem:[%s1 + $0x60] sm:$0xff]
      %v339 = vld [vmem:[%s1 + $0x68] sm:$0xff]
      %v340 = vld [vmem:[%s1 + $0x70] sm:$0xff]
      %v341 = vld [vmem:[%s1 + $0x78] sm:$0xff]
      %v342 = vld [vmem:[#allocation2] sm:$0xff]
      %v343 = vld [vmem:[#allocation2 + $0x8] sm:$0xff]
      %v344 = vld [vmem:[#allocation2 + $0x10] sm:$0xff]
      %v345 = vld [vmem:[#allocation2 + $0x18] sm:$0xff]
      %v346 = vld [vmem:[#allocation2 + $0x20] sm:$0xff]
      %v347 = vld [vmem:[#allocation2 + $0x28] sm:$0xff]
      %v348 = vld [vmem:[#allocation2 + $0x30] sm:$0xff]
      %v349 = vld [vmem:[#allocation2 + $0x38] sm:$0xff]
      %v350 = vld [vmem:[#allocation2 + $0x40] sm:$0xff]
      %v351 = vld [vmem:[#allocation2 + $0x48] sm:$0xff]
      %v352 = vld [vmem:[#allocation2 + $0x50] sm:$0xff]
      %v353 = vld [vmem:[#allocation2 + $0x58] sm:$0xff]
      %v354 = vld [vmem:[#allocation2 + $0x60] sm:$0xff]
      %v355 = vld [vmem:[#allocation2 + $0x68] sm:$0xff]
      %v356 = vld [vmem:[#allocation2 + $0x70] sm:$0xff]
      %v357 = vld [vmem:[#allocation2 + $0x78] sm:$0xff]
      %359 = vset.pattern.permute.xlu0 0
      %360 = vperm.xlu0 %359, %v326
      %v361 = vpop.permute.xlu0 %360
      %364 = vset.pattern.permute.xlu0 0
      %365 = vperm.xlu0 %364, %v327
      %v366 = vpop.permute.xlu0 %365
      %369 = vset.pattern.permute.xlu0 0
      %370 = vperm.xlu0 %369, %v328
      %v371 = vpop.permute.xlu0 %370
      %374 = vset.pattern.permute.xlu0 0
      %375 = vperm.xlu0 %374, %v329
      %v376 = vpop.permute.xlu0 %375
      %379 = vset.pattern.permute.xlu0 0
      %380 = vperm.xlu0 %379, %v330
      %v381 = vpop.permute.xlu0 %380
      %384 = vset.pattern.permute.xlu0 0
      %385 = vperm.xlu0 %384, %v331
      %v386 = vpop.permute.xlu0 %385
      %389 = vset.pattern.permute.xlu0 0
      %390 = vperm.xlu0 %389, %v332
      %v391 = vpop.permute.xlu0 %390
      %394 = vset.pattern.permute.xlu0 0
      %395 = vperm.xlu0 %394, %v333
      %v396 = vpop.permute.xlu0 %395
      %399 = vset.pattern.permute.xlu0 0
      %400 = vperm.xlu0 %399, %v334
      %v401 = vpop.permute.xlu0 %400
      %404 = vset.pattern.permute.xlu0 0
      %405 = vperm.xlu0 %404, %v335
      %v406 = vpop.permute.xlu0 %405
      %409 = vset.pattern.permute.xlu0 0
      %410 = vperm.xlu0 %409, %v336
      %v411 = vpop.permute.xlu0 %410
      %414 = vset.pattern.permute.xlu0 0
      %415 = vperm.xlu0 %414, %v337
      %v416 = vpop.permute.xlu0 %415
      %419 = vset.pattern.permute.xlu0 0
      %420 = vperm.xlu0 %419, %v338
      %v421 = vpop.permute.xlu0 %420
      %424 = vset.pattern.permute.xlu0 0
      %425 = vperm.xlu0 %424, %v339
      %v426 = vpop.permute.xlu0 %425
      %429 = vset.pattern.permute.xlu0 0
      %430 = vperm.xlu0 %429, %v340
      %v431 = vpop.permute.xlu0 %430
      %434 = vset.pattern.permute.xlu0 0
      %435 = vperm.xlu0 %434, %v341
      %v436 = vpop.permute.xlu0 %435
      %v438 = vsel %vm325, %v361, %v342
      %v439 = vsel %vm325, %v366, %v343
      %v440 = vsel %vm325, %v371, %v344
      %v441 = vsel %vm325, %v376, %v345
      %v442 = vsel %vm325, %v381, %v346
      %v443 = vsel %vm325, %v386, %v347
      %v444 = vsel %vm325, %v391, %v348
      %v445 = vsel %vm325, %v396, %v349
      %v446 = vsel %vm325, %v401, %v350
      %v447 = vsel %vm325, %v406, %v351
      %v448 = vsel %vm325, %v411, %v352
      %v449 = vsel %vm325, %v416, %v353
      %v450 = vsel %vm325, %v421, %v354
      %v451 = vsel %vm325, %v426, %v355
      %v452 = vsel %vm325, %v431, %v356
      %v453 = vsel %vm325, %v436, %v357
      %454 = vst [vmem:[#allocation3] sm:$0xff] %v438
      %455 = vst [vmem:[#allocation3 + $0x8] sm:$0xff] %v439
      %456 = vst [vmem:[#allocation3 + $0x10] sm:$0xff] %v440
      %457 = vst [vmem:[#allocation3 + $0x18] sm:$0xff] %v441
      %458 = vst [vmem:[#allocation3 + $0x20] sm:$0xff] %v442
      %459 = vst [vmem:[#allocation3 + $0x28] sm:$0xff] %v443
      %460 = vst [vmem:[#allocation3 + $0x30] sm:$0xff] %v444
      %461 = vst [vmem:[#allocation3 + $0x38] sm:$0xff] %v445
      %462 = vst [vmem:[#allocation3 + $0x40] sm:$0xff] %v446
      %463 = vst [vmem:[#allocation3 + $0x48] sm:$0xff] %v447
      %464 = vst [vmem:[#allocation3 + $0x50] sm:$0xff] %v448
      %465 = vst [vmem:[#allocation3 + $0x58] sm:$0xff] %v449
      %466 = vst [vmem:[#allocation3 + $0x60] sm:$0xff] %v450
      %467 = vst [vmem:[#allocation3 + $0x68] sm:$0xff] %v451
      %468 = vst [vmem:[#allocation3 + $0x70] sm:$0xff] %v452
      %469 = vst [vmem:[#allocation3 + $0x78] sm:$0xff] %v453
    $region21: #{tpu_custom_call.1} parent=1 // pred_fallthru
      _
    // Predicated region
    $region22: #{tpu_custom_call.1} parent=1 // pred_check
      _
    $region23: #{tpu_custom_call.1} parent=1 // pred_check_branch
      %471 = sbr.rel (0) target = $region25
    $region24: #{tpu_custom_call.1} parent=1 // pred_region
      %473 = vsyncadd [#allocation4], 0
      %s474 = sshll.u32 [#allocation3], 4
      %s475 = int_to_ptr.vmem [resolvable:$true] %s474
      %s476 = sshll.u32 %s3, 4
      %s477 = int_to_ptr.hbm [resolvable:$true] %s476
      %482 = dma.vmem_to_hbm [thread:$0]  %s475, 2048, %s477, [#allocation4], 128, 128, 8
    $region25: #{tpu_custom_call.1} parent=1 // pred_fallthru
      _
    // Predicated region
    $region26: #{tpu_custom_call.1} parent=1 // pred_check
      _
    $region27: #{tpu_custom_call.1} parent=1 // pred_check_branch
      %484 = sbr.rel (0) target = $region29
    $region28: #{tpu_custom_call.1} parent=1 // pred_region
      %486 = dma.done [#allocation4], 2048
    $region29: #{tpu_custom_call.1} parent=1 // pred_fallthru
      _
    %487 = vsyncpa [#allocation4], 1

</llo_original>
